<compile_context>
chip_gen: v7x
topology: tpu7x:2x2x1
jax: 0.10.0
libtpu: 0.0.40
codegen_flags: <defaults>
</compile_context>

<pallas_src>
import functools

import jax
import jax.numpy as jnp
from jax.experimental import pallas as pl
from jax.experimental.pallas import tpu as pltpu


_SENTINEL = 1.0e30  # > any |projection| at these scales; pushes padded rows to the
                    # bottom of the ascending sorts.


# ----------------------------------------------------------------------------
# Sublane (row-axis) permutation helpers built on pltpu.roll (XLU rotates).
# ----------------------------------------------------------------------------
def _xor_partner(x, row, opp, j, n_pad):
    """partner[i, :] = x[i ^ j, :] for a power-of-two j < n_pad.

    Built from two sublane rotates + a select on bit j of the row index.
    `opp` is a uniform boolean mask (computed once in-kernel) that is True iff
    pltpu.roll rotates opposite to jnp.roll, making the pairing convention-proof.
    """
    a = pltpu.roll(x, n_pad - j, axis=0)   # x[(i + j) % n_pad] under jnp.roll convention
    b = pltpu.roll(x, j, axis=0)           # x[(i - j) % n_pad] under jnp.roll convention
    bit_clear = (row & j) == 0             # True where i is the lower index of its pair
    return jnp.where(jnp.logical_xor(bit_clear, opp), a, b)


def _bitonic_sort_rows(x, row, opp, n_pad):
    """Ascending per-column bitonic sort along the sublane axis (n_pad power of 2)."""
    k = 2
    while k <= n_pad:
        j = k // 2
        while j >= 1:
            partner = _xor_partner(x, row, opp, j, n_pad)
            # keep max where exactly one of {i is lower of pair, block is ascending}
            keep_max = jnp.logical_xor((row & j) == 0, (row & k) == 0)
            x = jnp.where(keep_max, jnp.maximum(x, partner), jnp.minimum(x, partner))
            j //= 2
        k *= 2
    return x


def _reverse_rows(x, row, opp, n_pad):
    """x[i] -> x[n_pad - 1 - i]: compose XOR-partner permutations over every bit.

    This is the review's `jnp.flip(q1, axis=0)` expressed with the same sublane
    rotate primitive the sort already uses (keeps the kernel op set minimal).
    """
    j = 1
    while j < n_pad:
        x = _xor_partner(x, row, opp, j, n_pad)
        j *= 2
    return x


# ----------------------------------------------------------------------------
# Fused kernel: projection (MXU) + per-column sorts + centered-moment FGW.
# One grid step handles one 128-wide block of projection lanes.
# ----------------------------------------------------------------------------
def _sliced_fgw_kernel(z_ref, g_ref, proj_ref, out_ref, *, num_valid, beta):
    n_pad = z_ref.shape[0]
    lanes = proj_ref.shape[1]
    nf = float(num_valid)

    # --- Projection: two small MXU matmuls (z / gmm kept as separate inputs). ---
    proj = proj_ref[...]                                                    # [D, 128]
    pp_raw = jnp.dot(z_ref[...], proj, preferred_element_type=jnp.float32)  # [n_pad, 128]
    qq_raw = jnp.dot(g_ref[...], proj, preferred_element_type=jnp.float32)  # [n_pad, 128]

    row = jax.lax.broadcasted_iota(jnp.int32, (n_pad, lanes), 0)
    valid = row < num_valid

    # Rotate-direction probe (uniform mask): makes the sort network independent of
    # whether pltpu.roll follows jnp.roll's convention or its mirror.
    rowf = row.astype(jnp.float32)
    probe = pltpu.roll(rowf, 1, axis=0)
    opp = probe != jnp.where(row == 0, float(n_pad - 1), rowf - 1.0)

    # --- In-kernel per-column ascending sorts; padded rows carry a +sentinel so
    #     they land past all valid values. ---
    pp = _bitonic_sort_rows(jnp.where(valid, pp_raw, _SENTINEL), row, opp, n_pad)
    q1 = _bitonic_sort_rows(jnp.where(valid, qq_raw, _SENTINEL), row, opp, n_pad)

    # Descending prior = row reverse of the ascending prior (plus a realign rotate
    # when rows are padded) — no NxN exchange matrix, no extra MXU work.
    q2 = _reverse_rows(q1, row, opp, n_pad)
    if num_valid != n_pad:
        a = pltpu.roll(q2, num_valid % n_pad, axis=0)            # jnp.roll convention
        b = pltpu.roll(q2, (n_pad - num_valid) % n_pad, axis=0)  # mirrored convention
        q2 = jnp.where(opp, b, a)

    # --- Masked, per-column-centered moments. Centering is exact for the pairwise
    #     (translation-invariant) Gromov term and removes the S1/T1 cross terms. ---
    pp = jnp.where(valid, pp, 0.0)
    q1 = jnp.where(valid, q1, 0.0)
    q2 = jnp.where(valid, q2, 0.0)

    inv_n = 1.0 / nf
    mu_p = jnp.sum(pp, axis=0, keepdims=True) * inv_n   # [1, 128]
    mu_q = jnp.sum(q1, axis=0, keepdims=True) * inv_n   # same mean for q1 and q2

    pc = jnp.where(valid, pp - mu_p, 0.0)
    q1c = jnp.where(valid, q1 - mu_q, 0.0)
    q2c = jnp.where(valid, q2 - mu_q, 0.0)

    pc2, q1c2, q2c2 = pc * pc, q1c * q1c, q2c * q2c
    s2 = jnp.sum(pc2, axis=0, keepdims=True)
    s4 = jnp.sum(pc2 * pc2, axis=0, keepdims=True)
    t2 = jnp.sum(q1c2, axis=0, keepdims=True)
    t4 = jnp.sum(q1c2 * q1c2, axis=0, keepdims=True)
    m11_1 = jnp.sum(pc * q1c, axis=0, keepdims=True)
    m22_1 = jnp.sum(pc2 * q1c2, axis=0, keepdims=True)
    m11_2 = jnp.sum(pc * q2c, axis=0, keepdims=True)
    m22_2 = jnp.sum(pc2 * q2c2, axis=0, keepdims=True)

    # 1-D Wasserstein^2 terms from the same moments (no extra [N,128] passes):
    #   sum_i (p_i - q_i)^2 = S2c + T2c - 2*M11c + N*(mu_p - mu_q)^2
    dmu2 = (mu_p - mu_q) * (mu_p - mu_q)
    w1 = s2 + t2 - 2.0 * m11_1 + nf * dmu2
    w2 = s2 + t2 - 2.0 * m11_2 + nf * dmu2

    # Gromov terms, exact separable expansion with centered columns (S1c = T1c = 0):
    #   sum_{ij} (p_i-p_j)^4             = 2N*S4 + 6*S2^2
    #   sum_{ij} (p_i-p_j)^2 (q_i-q_j)^2 = 2N*M22 + 2*S2*T2 + 4*M11^2
    a_post = 2.0 * nf * s4 + 6.0 * s2 * s2
    b_prio = 2.0 * nf * t4 + 6.0 * t2 * t2
    c1 = 2.0 * nf * m22_1 + 2.0 * s2 * t2 + 4.0 * m11_1 * m11_1
    c2 = 2.0 * nf * m22_2 + 2.0 * s2 * t2 + 4.0 * m11_2 * m11_2
    inv_n2 = inv_n * inv_n
    gw1 = (a_post + b_prio - 2.0 * c1) * inv_n2
    gw2 = (a_post + b_prio - 2.0 * c2) * inv_n2

    fgw1 = (1.0 - beta) * w1 + beta * gw1
    fgw2 = (1.0 - beta) * w2 + beta * gw2
    # Padded projection lanes are exactly zero through the whole pipeline, so no
    # lane mask is needed on the store; they contribute 0 to the final sum.
    out_ref[...] = jnp.minimum(fgw1, fgw2)


def _sliced_fgw_blocks(z_pad, gmm_pad, proj_pad, *, num_valid, beta):
    n_pad, d = z_pad.shape
    k_pad = proj_pad.shape[1]
    nb = k_pad // 128
    kernel = functools.partial(_sliced_fgw_kernel, num_valid=num_valid, beta=beta)
    return pl.pallas_call(
        kernel,
        out_shape=jax.ShapeDtypeStruct((1, k_pad), jnp.float32),
        grid=(nb,),
        in_specs=[
            pl.BlockSpec((n_pad, d), lambda j: (0, 0)),
            pl.BlockSpec((n_pad, d), lambda j: (0, 0)),
            pl.BlockSpec((d, 128), lambda j: (0, j)),
        ],
        out_specs=pl.BlockSpec((1, 128), lambda j: (0, j)),
        compiler_params=pltpu.CompilerParams(
            # One grid step per 128-lane projection block; 'parallel' only buys the
            # second v7x TensorCore once num_projection pads to >= 256 lanes.
            dimension_semantics=("parallel",),
        ),
    )(z_pad, gmm_pad, proj_pad)


# ----------------------------------------------------------------------------
# Glue (plain JAX, fused by XLA under jit): RNG, L2 normalize, zero-padding.
# ----------------------------------------------------------------------------
def _l2_normalize(x, eps=1e-12):
    # matches torch.nn.functional.normalize(x, p=2, dim=1)
    norm = jnp.sqrt(jnp.sum(x * x, axis=1, keepdims=True))
    return x / jnp.maximum(norm, eps)


@functools.partial(jax.jit, static_argnames=("num_projection", "beta"))
def representation_collapse_loss(z, key, num_projection=10, beta=0.1):
    """Forward of RepresentationCollapseLoss.

    The PyTorch forward draws fresh Gaussian `gmm_samples` and fresh random
    projections every call; the GMMPrior parameters and the module's self.beta
    are never used (sliced_fgw_distance runs with its default beta=0.1).
    """
    n, d = z.shape
    k_gmm, k_proj = jax.random.split(key)
    gmm_samples = _l2_normalize(jax.random.normal(k_gmm, (n, d), jnp.float32))
    projections = jax.random.normal(k_proj, (d, num_projection), jnp.float32)

    # Lane-dense padding: projection columns to a multiple of 128 (padded columns
    # project everything to exactly 0, contributing 0 to the loss); rows to a
    # power of two >= 8 so the bitonic network applies (padded rows are pushed
    # past the valid ones with a sentinel inside the kernel).
    k_pad = 128 * pl.cdiv(num_projection, 128)
    n_pad = max(8, pl.next_power_of_2(n))
    proj_pad = jnp.pad(projections, ((0, 0), (0, k_pad - num_projection)))
    z_pad = jnp.pad(z.astype(jnp.float32), ((0, n_pad - n), (0, 0)))
    gmm_pad = jnp.pad(gmm_samples, ((0, n_pad - n), (0, 0)))

    fgw = _sliced_fgw_blocks(z_pad, gmm_pad, proj_pad, num_valid=n, beta=beta)
    return jnp.sum(fgw) / num_projection


if __name__ == "__main__":
    key = jax.random.PRNGKey(0)
    k_z, k_fwd, k_mu, k_lv = jax.random.split(key, 4)

    num_component, emb_dim = 4, 32
    num_projection = 10
    batch = 8

    # GMMPrior parameters (module __init__ shapes): never read by the reference
    # forward; constructed only for shape parity with the PyTorch module.
    mu = jax.random.normal(k_mu, (num_component, emb_dim), jnp.float32)
    logvar = jax.random.normal(k_lv, (num_component, emb_dim), jnp.float32)

    z = jax.random.normal(k_z, (batch, emb_dim), jnp.float32)

    loss = representation_collapse_loss(z, k_fwd, num_projection=num_projection)
    jax.block_until_ready(loss)
    print("KERNEL_OK")
</pallas_src>

<mosaic_0001>
module attributes {stable_mosaic.version = 11 : i64} {
  func.func @_sliced_fgw_kernel(%arg0: i32, %arg1: memref<8x32xf32, #tpu.memory_space<vmem>>, %arg2: memref<8x32xf32, #tpu.memory_space<vmem>>, %arg3: memref<32x128xf32, #tpu.memory_space<vmem>>, %arg4: memref<1x128xf32, #tpu.memory_space<vmem>>) attributes {dimension_semantics = [#tpu.dimension_semantics<parallel>], iteration_bounds = array<i64: 1>, scalar_prefetch = 0 : i64, scratch_operands = 0 : i64, tpu.core_type = #tpu.core_type<tc>, window_params = [{pipeline_mode = #tpu.pipeline_mode<synchronous>, transform_indices = @transform_0, window_bounds = array<i64: 8, 32>}, {pipeline_mode = #tpu.pipeline_mode<synchronous>, transform_indices = @transform_1, window_bounds = array<i64: 8, 32>}, {transform_indices = @transform_2, window_bounds = array<i64: 32, 128>}, {transform_indices = @transform_3, window_bounds = array<i64: 1, 128>}]} {
    %c0 = arith.constant 0 : index
    %c0_0 = arith.constant 0 : index
    %0 = vector.load %arg3[%c0, %c0_0] : memref<32x128xf32, #tpu.memory_space<vmem>>, vector<32x128xf32>
    %c0_1 = arith.constant 0 : index
    %c0_2 = arith.constant 0 : index
    %1 = vector.load %arg1[%c0_1, %c0_2] : memref<8x32xf32, #tpu.memory_space<vmem>>, vector<8x32xf32>
    %cst = arith.constant dense<0.000000e+00> : vector<8x128xf32>
    %2 = tpu.matmul %1, %0, %cst {dimension_numbers = #tpu.dot_dimension_numbers<[1], [0], [0], [1], [0, 0, 1, 1], [], []>} : vector<8x32xf32>, vector<32x128xf32>, vector<8x128xf32> -> vector<8x128xf32>
    %c0_3 = arith.constant 0 : index
    %c0_4 = arith.constant 0 : index
    %3 = vector.load %arg2[%c0_3, %c0_4] : memref<8x32xf32, #tpu.memory_space<vmem>>, vector<8x32xf32>
    %cst_5 = arith.constant dense<0.000000e+00> : vector<8x128xf32>
    %4 = tpu.matmul %3, %0, %cst_5 {dimension_numbers = #tpu.dot_dimension_numbers<[1], [0], [0], [1], [0, 0, 1, 1], [], []>} : vector<8x32xf32>, vector<32x128xf32>, vector<8x128xf32> -> vector<8x128xf32>
    %5 = tpu.iota {dimensions = array<i32: 0>} : vector<8x128xi32>
    %c8_i32 = arith.constant 8 : i32
    %6 = vector.broadcast %c8_i32 : i32 to vector<8x128xi32>
    %7 = arith.cmpi slt, %5, %6 : vector<8x128xi32>
    %8 = arith.sitofp %5 : vector<8x128xi32> to vector<8x128xf32>
    %c1_i32 = arith.constant 1 : i32
    %9 = tpu.dynamic_rotate %8 by %c1_i32 dim 0 : vector<8x128xf32>, i32 -> vector<8x128xf32>
    %c0_i32 = arith.constant 0 : i32
    %10 = vector.broadcast %c0_i32 : i32 to vector<8x128xi32>
    %11 = arith.cmpi eq, %5, %10 : vector<8x128xi32>
    %cst_6 = arith.constant 1.000000e+00 : f32
    %12 = vector.broadcast %cst_6 : f32 to vector<8x128xf32>
    %13 = arith.subf %8, %12 : vector<8x128xf32>
    %cst_7 = arith.constant 7.000000e+00 : f32
    %14 = vector.broadcast %cst_7 : f32 to vector<8x128xf32>
    %15 = arith.select %11, %14, %13 : vector<8x128xi1>, vector<8x128xf32>
    %16 = arith.cmpf one, %9, %15 : vector<8x128xf32>
    %cst_8 = arith.constant 1.000000e+30 : f32
    %17 = vector.broadcast %cst_8 : f32 to vector<8x128xf32>
    %18 = arith.select %7, %2, %17 : vector<8x128xi1>, vector<8x128xf32>
    %c7_i32 = arith.constant 7 : i32
    %19 = tpu.dynamic_rotate %18 by %c7_i32 dim 0 : vector<8x128xf32>, i32 -> vector<8x128xf32>
    %c1_i32_9 = arith.constant 1 : i32
    %20 = tpu.dynamic_rotate %18 by %c1_i32_9 dim 0 : vector<8x128xf32>, i32 -> vector<8x128xf32>
    %c1_i32_10 = arith.constant 1 : i32
    %21 = vector.broadcast %c1_i32_10 : i32 to vector<8x128xi32>
    %22 = arith.andi %5, %21 : vector<8x128xi32>
    %c0_i32_11 = arith.constant 0 : i32
    %23 = vector.broadcast %c0_i32_11 : i32 to vector<8x128xi32>
    %24 = arith.cmpi eq, %22, %23 : vector<8x128xi32>
    %25 = arith.xori %24, %16 : vector<8x128xi1>
    %26 = arith.select %25, %19, %20 : vector<8x128xi1>, vector<8x128xf32>
    %c1_i32_12 = arith.constant 1 : i32
    %27 = vector.broadcast %c1_i32_12 : i32 to vector<8x128xi32>
    %28 = arith.andi %5, %27 : vector<8x128xi32>
    %c0_i32_13 = arith.constant 0 : i32
    %29 = vector.broadcast %c0_i32_13 : i32 to vector<8x128xi32>
    %30 = arith.cmpi eq, %28, %29 : vector<8x128xi32>
    %c2_i32 = arith.constant 2 : i32
    %31 = vector.broadcast %c2_i32 : i32 to vector<8x128xi32>
    %32 = arith.andi %5, %31 : vector<8x128xi32>
    %c0_i32_14 = arith.constant 0 : i32
    %33 = vector.broadcast %c0_i32_14 : i32 to vector<8x128xi32>
    %34 = arith.cmpi eq, %32, %33 : vector<8x128xi32>
    %35 = arith.xori %30, %34 : vector<8x128xi1>
    %36 = arith.maximumf %18, %26 : vector<8x128xf32>
    %37 = arith.minimumf %18, %26 : vector<8x128xf32>
    %38 = arith.select %35, %36, %37 : vector<8x128xi1>, vector<8x128xf32>
    %c6_i32 = arith.constant 6 : i32
    %39 = tpu.dynamic_rotate %38 by %c6_i32 dim 0 : vector<8x128xf32>, i32 -> vector<8x128xf32>
    %c2_i32_15 = arith.constant 2 : i32
    %40 = tpu.dynamic_rotate %38 by %c2_i32_15 dim 0 : vector<8x128xf32>, i32 -> vector<8x128xf32>
    %c2_i32_16 = arith.constant 2 : i32
    %41 = vector.broadcast %c2_i32_16 : i32 to vector<8x128xi32>
    %42 = arith.andi %5, %41 : vector<8x128xi32>
    %c0_i32_17 = arith.constant 0 : i32
    %43 = vector.broadcast %c0_i32_17 : i32 to vector<8x128xi32>
    %44 = arith.cmpi eq, %42, %43 : vector<8x128xi32>
    %45 = arith.xori %44, %16 : vector<8x128xi1>
    %46 = arith.select %45, %39, %40 : vector<8x128xi1>, vector<8x128xf32>
    %c2_i32_18 = arith.constant 2 : i32
    %47 = vector.broadcast %c2_i32_18 : i32 to vector<8x128xi32>
    %48 = arith.andi %5, %47 : vector<8x128xi32>
    %c0_i32_19 = arith.constant 0 : i32
    %49 = vector.broadcast %c0_i32_19 : i32 to vector<8x128xi32>
    %50 = arith.cmpi eq, %48, %49 : vector<8x128xi32>
    %c4_i32 = arith.constant 4 : i32
    %51 = vector.broadcast %c4_i32 : i32 to vector<8x128xi32>
    %52 = arith.andi %5, %51 : vector<8x128xi32>
    %c0_i32_20 = arith.constant 0 : i32
    %53 = vector.broadcast %c0_i32_20 : i32 to vector<8x128xi32>
    %54 = arith.cmpi eq, %52, %53 : vector<8x128xi32>
    %55 = arith.xori %50, %54 : vector<8x128xi1>
    %56 = arith.maximumf %38, %46 : vector<8x128xf32>
    %57 = arith.minimumf %38, %46 : vector<8x128xf32>
    %58 = arith.select %55, %56, %57 : vector<8x128xi1>, vector<8x128xf32>
    %c7_i32_21 = arith.constant 7 : i32
    %59 = tpu.dynamic_rotate %58 by %c7_i32_21 dim 0 : vector<8x128xf32>, i32 -> vector<8x128xf32>
    %c1_i32_22 = arith.constant 1 : i32
    %60 = tpu.dynamic_rotate %58 by %c1_i32_22 dim 0 : vector<8x128xf32>, i32 -> vector<8x128xf32>
    %c1_i32_23 = arith.constant 1 : i32
    %61 = vector.broadcast %c1_i32_23 : i32 to vector<8x128xi32>
    %62 = arith.andi %5, %61 : vector<8x128xi32>
    %c0_i32_24 = arith.constant 0 : i32
    %63 = vector.broadcast %c0_i32_24 : i32 to vector<8x128xi32>
    %64 = arith.cmpi eq, %62, %63 : vector<8x128xi32>
    %65 = arith.xori %64, %16 : vector<8x128xi1>
    %66 = arith.select %65, %59, %60 : vector<8x128xi1>, vector<8x128xf32>
    %c1_i32_25 = arith.constant 1 : i32
    %67 = vector.broadcast %c1_i32_25 : i32 to vector<8x128xi32>
    %68 = arith.andi %5, %67 : vector<8x128xi32>
    %c0_i32_26 = arith.constant 0 : i32
    %69 = vector.broadcast %c0_i32_26 : i32 to vector<8x128xi32>
    %70 = arith.cmpi eq, %68, %69 : vector<8x128xi32>
    %c4_i32_27 = arith.constant 4 : i32
    %71 = vector.broadcast %c4_i32_27 : i32 to vector<8x128xi32>
    %72 = arith.andi %5, %71 : vector<8x128xi32>
    %c0_i32_28 = arith.constant 0 : i32
    %73 = vector.broadcast %c0_i32_28 : i32 to vector<8x128xi32>
    %74 = arith.cmpi eq, %72, %73 : vector<8x128xi32>
    %75 = arith.xori %70, %74 : vector<8x128xi1>
    %76 = arith.maximumf %58, %66 : vector<8x128xf32>
    %77 = arith.minimumf %58, %66 : vector<8x128xf32>
    %78 = arith.select %75, %76, %77 : vector<8x128xi1>, vector<8x128xf32>
    %c4_i32_29 = arith.constant 4 : i32
    %79 = tpu.dynamic_rotate %78 by %c4_i32_29 dim 0 : vector<8x128xf32>, i32 -> vector<8x128xf32>
    %c4_i32_30 = arith.constant 4 : i32
    %80 = tpu.dynamic_rotate %78 by %c4_i32_30 dim 0 : vector<8x128xf32>, i32 -> vector<8x128xf32>
    %c4_i32_31 = arith.constant 4 : i32
    %81 = vector.broadcast %c4_i32_31 : i32 to vector<8x128xi32>
    %82 = arith.andi %5, %81 : vector<8x128xi32>
    %c0_i32_32 = arith.constant 0 : i32
    %83 = vector.broadcast %c0_i32_32 : i32 to vector<8x128xi32>
    %84 = arith.cmpi eq, %82, %83 : vector<8x128xi32>
    %85 = arith.xori %84, %16 : vector<8x128xi1>
    %86 = arith.select %85, %79, %80 : vector<8x128xi1>, vector<8x128xf32>
    %c4_i32_33 = arith.constant 4 : i32
    %87 = vector.broadcast %c4_i32_33 : i32 to vector<8x128xi32>
    %88 = arith.andi %5, %87 : vector<8x128xi32>
    %c0_i32_34 = arith.constant 0 : i32
    %89 = vector.broadcast %c0_i32_34 : i32 to vector<8x128xi32>
    %90 = arith.cmpi eq, %88, %89 : vector<8x128xi32>
    %c8_i32_35 = arith.constant 8 : i32
    %91 = vector.broadcast %c8_i32_35 : i32 to vector<8x128xi32>
    %92 = arith.andi %5, %91 : vector<8x128xi32>
    %c0_i32_36 = arith.constant 0 : i32
    %93 = vector.broadcast %c0_i32_36 : i32 to vector<8x128xi32>
    %94 = arith.cmpi eq, %92, %93 : vector<8x128xi32>
    %95 = arith.xori %90, %94 : vector<8x128xi1>
    %96 = arith.maximumf %78, %86 : vector<8x128xf32>
    %97 = arith.minimumf %78, %86 : vector<8x128xf32>
    %98 = arith.select %95, %96, %97 : vector<8x128xi1>, vector<8x128xf32>
    %c6_i32_37 = arith.constant 6 : i32
    %99 = tpu.dynamic_rotate %98 by %c6_i32_37 dim 0 : vector<8x128xf32>, i32 -> vector<8x128xf32>
    %c2_i32_38 = arith.constant 2 : i32
    %100 = tpu.dynamic_rotate %98 by %c2_i32_38 dim 0 : vector<8x128xf32>, i32 -> vector<8x128xf32>
    %c2_i32_39 = arith.constant 2 : i32
    %101 = vector.broadcast %c2_i32_39 : i32 to vector<8x128xi32>
    %102 = arith.andi %5, %101 : vector<8x128xi32>
    %c0_i32_40 = arith.constant 0 : i32
    %103 = vector.broadcast %c0_i32_40 : i32 to vector<8x128xi32>
    %104 = arith.cmpi eq, %102, %103 : vector<8x128xi32>
    %105 = arith.xori %104, %16 : vector<8x128xi1>
    %106 = arith.select %105, %99, %100 : vector<8x128xi1>, vector<8x128xf32>
    %c2_i32_41 = arith.constant 2 : i32
    %107 = vector.broadcast %c2_i32_41 : i32 to vector<8x128xi32>
    %108 = arith.andi %5, %107 : vector<8x128xi32>
    %c0_i32_42 = arith.constant 0 : i32
    %109 = vector.broadcast %c0_i32_42 : i32 to vector<8x128xi32>
    %110 = arith.cmpi eq, %108, %109 : vector<8x128xi32>
    %c8_i32_43 = arith.constant 8 : i32
    %111 = vector.broadcast %c8_i32_43 : i32 to vector<8x128xi32>
    %112 = arith.andi %5, %111 : vector<8x128xi32>
    %c0_i32_44 = arith.constant 0 : i32
    %113 = vector.broadcast %c0_i32_44 : i32 to vector<8x128xi32>
    %114 = arith.cmpi eq, %112, %113 : vector<8x128xi32>
    %115 = arith.xori %110, %114 : vector<8x128xi1>
    %116 = arith.maximumf %98, %106 : vector<8x128xf32>
    %117 = arith.minimumf %98, %106 : vector<8x128xf32>
    %118 = arith.select %115, %116, %117 : vector<8x128xi1>, vector<8x128xf32>
    %c7_i32_45 = arith.constant 7 : i32
    %119 = tpu.dynamic_rotate %118 by %c7_i32_45 dim 0 : vector<8x128xf32>, i32 -> vector<8x128xf32>
    %c1_i32_46 = arith.constant 1 : i32
    %120 = tpu.dynamic_rotate %118 by %c1_i32_46 dim 0 : vector<8x128xf32>, i32 -> vector<8x128xf32>
    %c1_i32_47 = arith.constant 1 : i32
    %121 = vector.broadcast %c1_i32_47 : i32 to vector<8x128xi32>
    %122 = arith.andi %5, %121 : vector<8x128xi32>
    %c0_i32_48 = arith.constant 0 : i32
    %123 = vector.broadcast %c0_i32_48 : i32 to vector<8x128xi32>
    %124 = arith.cmpi eq, %122, %123 : vector<8x128xi32>
    %125 = arith.xori %124, %16 : vector<8x128xi1>
    %126 = arith.select %125, %119, %120 : vector<8x128xi1>, vector<8x128xf32>
    %c1_i32_49 = arith.constant 1 : i32
    %127 = vector.broadcast %c1_i32_49 : i32 to vector<8x128xi32>
    %128 = arith.andi %5, %127 : vector<8x128xi32>
    %c0_i32_50 = arith.constant 0 : i32
    %129 = vector.broadcast %c0_i32_50 : i32 to vector<8x128xi32>
    %130 = arith.cmpi eq, %128, %129 : vector<8x128xi32>
    %c8_i32_51 = arith.constant 8 : i32
    %131 = vector.broadcast %c8_i32_51 : i32 to vector<8x128xi32>
    %132 = arith.andi %5, %131 : vector<8x128xi32>
    %c0_i32_52 = arith.constant 0 : i32
    %133 = vector.broadcast %c0_i32_52 : i32 to vector<8x128xi32>
    %134 = arith.cmpi eq, %132, %133 : vector<8x128xi32>
    %135 = arith.xori %130, %134 : vector<8x128xi1>
    %136 = arith.maximumf %118, %126 : vector<8x128xf32>
    %137 = arith.minimumf %118, %126 : vector<8x128xf32>
    %138 = arith.select %135, %136, %137 : vector<8x128xi1>, vector<8x128xf32>
    %cst_53 = arith.constant 1.000000e+30 : f32
    %139 = vector.broadcast %cst_53 : f32 to vector<8x128xf32>
    %140 = arith.select %7, %4, %139 : vector<8x128xi1>, vector<8x128xf32>
    %c7_i32_54 = arith.constant 7 : i32
    %141 = tpu.dynamic_rotate %140 by %c7_i32_54 dim 0 : vector<8x128xf32>, i32 -> vector<8x128xf32>
    %c1_i32_55 = arith.constant 1 : i32
    %142 = tpu.dynamic_rotate %140 by %c1_i32_55 dim 0 : vector<8x128xf32>, i32 -> vector<8x128xf32>
    %c1_i32_56 = arith.constant 1 : i32
    %143 = vector.broadcast %c1_i32_56 : i32 to vector<8x128xi32>
    %144 = arith.andi %5, %143 : vector<8x128xi32>
    %c0_i32_57 = arith.constant 0 : i32
    %145 = vector.broadcast %c0_i32_57 : i32 to vector<8x128xi32>
    %146 = arith.cmpi eq, %144, %145 : vector<8x128xi32>
    %147 = arith.xori %146, %16 : vector<8x128xi1>
    %148 = arith.select %147, %141, %142 : vector<8x128xi1>, vector<8x128xf32>
    %c1_i32_58 = arith.constant 1 : i32
    %149 = vector.broadcast %c1_i32_58 : i32 to vector<8x128xi32>
    %150 = arith.andi %5, %149 : vector<8x128xi32>
    %c0_i32_59 = arith.constant 0 : i32
    %151 = vector.broadcast %c0_i32_59 : i32 to vector<8x128xi32>
    %152 = arith.cmpi eq, %150, %151 : vector<8x128xi32>
    %c2_i32_60 = arith.constant 2 : i32
    %153 = vector.broadcast %c2_i32_60 : i32 to vector<8x128xi32>
    %154 = arith.andi %5, %153 : vector<8x128xi32>
    %c0_i32_61 = arith.constant 0 : i32
    %155 = vector.broadcast %c0_i32_61 : i32 to vector<8x128xi32>
    %156 = arith.cmpi eq, %154, %155 : vector<8x128xi32>
    %157 = arith.xori %152, %156 : vector<8x128xi1>
    %158 = arith.maximumf %140, %148 : vector<8x128xf32>
    %159 = arith.minimumf %140, %148 : vector<8x128xf32>
    %160 = arith.select %157, %158, %159 : vector<8x128xi1>, vector<8x128xf32>
    %c6_i32_62 = arith.constant 6 : i32
    %161 = tpu.dynamic_rotate %160 by %c6_i32_62 dim 0 : vector<8x128xf32>, i32 -> vector<8x128xf32>
    %c2_i32_63 = arith.constant 2 : i32
    %162 = tpu.dynamic_rotate %160 by %c2_i32_63 dim 0 : vector<8x128xf32>, i32 -> vector<8x128xf32>
    %c2_i32_64 = arith.constant 2 : i32
    %163 = vector.broadcast %c2_i32_64 : i32 to vector<8x128xi32>
    %164 = arith.andi %5, %163 : vector<8x128xi32>
    %c0_i32_65 = arith.constant 0 : i32
    %165 = vector.broadcast %c0_i32_65 : i32 to vector<8x128xi32>
    %166 = arith.cmpi eq, %164, %165 : vector<8x128xi32>
    %167 = arith.xori %166, %16 : vector<8x128xi1>
    %168 = arith.select %167, %161, %162 : vector<8x128xi1>, vector<8x128xf32>
    %c2_i32_66 = arith.constant 2 : i32
    %169 = vector.broadcast %c2_i32_66 : i32 to vector<8x128xi32>
    %170 = arith.andi %5, %169 : vector<8x128xi32>
    %c0_i32_67 = arith.constant 0 : i32
    %171 = vector.broadcast %c0_i32_67 : i32 to vector<8x128xi32>
    %172 = arith.cmpi eq, %170, %171 : vector<8x128xi32>
    %c4_i32_68 = arith.constant 4 : i32
    %173 = vector.broadcast %c4_i32_68 : i32 to vector<8x128xi32>
    %174 = arith.andi %5, %173 : vector<8x128xi32>
    %c0_i32_69 = arith.constant 0 : i32
    %175 = vector.broadcast %c0_i32_69 : i32 to vector<8x128xi32>
    %176 = arith.cmpi eq, %174, %175 : vector<8x128xi32>
    %177 = arith.xori %172, %176 : vector<8x128xi1>
    %178 = arith.maximumf %160, %168 : vector<8x128xf32>
    %179 = arith.minimumf %160, %168 : vector<8x128xf32>
    %180 = arith.select %177, %178, %179 : vector<8x128xi1>, vector<8x128xf32>
    %c7_i32_70 = arith.constant 7 : i32
    %181 = tpu.dynamic_rotate %180 by %c7_i32_70 dim 0 : vector<8x128xf32>, i32 -> vector<8x128xf32>
    %c1_i32_71 = arith.constant 1 : i32
    %182 = tpu.dynamic_rotate %180 by %c1_i32_71 dim 0 : vector<8x128xf32>, i32 -> vector<8x128xf32>
    %c1_i32_72 = arith.constant 1 : i32
    %183 = vector.broadcast %c1_i32_72 : i32 to vector<8x128xi32>
    %184 = arith.andi %5, %183 : vector<8x128xi32>
    %c0_i32_73 = arith.constant 0 : i32
    %185 = vector.broadcast %c0_i32_73 : i32 to vector<8x128xi32>
    %186 = arith.cmpi eq, %184, %185 : vector<8x128xi32>
    %187 = arith.xori %186, %16 : vector<8x128xi1>
    %188 = arith.select %187, %181, %182 : vector<8x128xi1>, vector<8x128xf32>
    %c1_i32_74 = arith.constant 1 : i32
    %189 = vector.broadcast %c1_i32_74 : i32 to vector<8x128xi32>
    %190 = arith.andi %5, %189 : vector<8x128xi32>
    %c0_i32_75 = arith.constant 0 : i32
    %191 = vector.broadcast %c0_i32_75 : i32 to vector<8x128xi32>
    %192 = arith.cmpi eq, %190, %191 : vector<8x128xi32>
    %c4_i32_76 = arith.constant 4 : i32
    %193 = vector.broadcast %c4_i32_76 : i32 to vector<8x128xi32>
    %194 = arith.andi %5, %193 : vector<8x128xi32>
    %c0_i32_77 = arith.constant 0 : i32
    %195 = vector.broadcast %c0_i32_77 : i32 to vector<8x128xi32>
    %196 = arith.cmpi eq, %194, %195 : vector<8x128xi32>
    %197 = arith.xori %192, %196 : vector<8x128xi1>
    %198 = arith.maximumf %180, %188 : vector<8x128xf32>
    %199 = arith.minimumf %180, %188 : vector<8x128xf32>
    %200 = arith.select %197, %198, %199 : vector<8x128xi1>, vector<8x128xf32>
    %c4_i32_78 = arith.constant 4 : i32
    %201 = tpu.dynamic_rotate %200 by %c4_i32_78 dim 0 : vector<8x128xf32>, i32 -> vector<8x128xf32>
    %c4_i32_79 = arith.constant 4 : i32
    %202 = tpu.dynamic_rotate %200 by %c4_i32_79 dim 0 : vector<8x128xf32>, i32 -> vector<8x128xf32>
    %c4_i32_80 = arith.constant 4 : i32
    %203 = vector.broadcast %c4_i32_80 : i32 to vector<8x128xi32>
    %204 = arith.andi %5, %203 : vector<8x128xi32>
    %c0_i32_81 = arith.constant 0 : i32
    %205 = vector.broadcast %c0_i32_81 : i32 to vector<8x128xi32>
    %206 = arith.cmpi eq, %204, %205 : vector<8x128xi32>
    %207 = arith.xori %206, %16 : vector<8x128xi1>
    %208 = arith.select %207, %201, %202 : vector<8x128xi1>, vector<8x128xf32>
    %c4_i32_82 = arith.constant 4 : i32
    %209 = vector.broadcast %c4_i32_82 : i32 to vector<8x128xi32>
    %210 = arith.andi %5, %209 : vector<8x128xi32>
    %c0_i32_83 = arith.constant 0 : i32
    %211 = vector.broadcast %c0_i32_83 : i32 to vector<8x128xi32>
    %212 = arith.cmpi eq, %210, %211 : vector<8x128xi32>
    %c8_i32_84 = arith.constant 8 : i32
    %213 = vector.broadcast %c8_i32_84 : i32 to vector<8x128xi32>
    %214 = arith.andi %5, %213 : vector<8x128xi32>
    %c0_i32_85 = arith.constant 0 : i32
    %215 = vector.broadcast %c0_i32_85 : i32 to vector<8x128xi32>
    %216 = arith.cmpi eq, %214, %215 : vector<8x128xi32>
    %217 = arith.xori %212, %216 : vector<8x128xi1>
    %218 = arith.maximumf %200, %208 : vector<8x128xf32>
    %219 = arith.minimumf %200, %208 : vector<8x128xf32>
    %220 = arith.select %217, %218, %219 : vector<8x128xi1>, vector<8x128xf32>
    %c6_i32_86 = arith.constant 6 : i32
    %221 = tpu.dynamic_rotate %220 by %c6_i32_86 dim 0 : vector<8x128xf32>, i32 -> vector<8x128xf32>
    %c2_i32_87 = arith.constant 2 : i32
    %222 = tpu.dynamic_rotate %220 by %c2_i32_87 dim 0 : vector<8x128xf32>, i32 -> vector<8x128xf32>
    %c2_i32_88 = arith.constant 2 : i32
    %223 = vector.broadcast %c2_i32_88 : i32 to vector<8x128xi32>
    %224 = arith.andi %5, %223 : vector<8x128xi32>
    %c0_i32_89 = arith.constant 0 : i32
    %225 = vector.broadcast %c0_i32_89 : i32 to vector<8x128xi32>
    %226 = arith.cmpi eq, %224, %225 : vector<8x128xi32>
    %227 = arith.xori %226, %16 : vector<8x128xi1>
    %228 = arith.select %227, %221, %222 : vector<8x128xi1>, vector<8x128xf32>
    %c2_i32_90 = arith.constant 2 : i32
    %229 = vector.broadcast %c2_i32_90 : i32 to vector<8x128xi32>
    %230 = arith.andi %5, %229 : vector<8x128xi32>
    %c0_i32_91 = arith.constant 0 : i32
    %231 = vector.broadcast %c0_i32_91 : i32 to vector<8x128xi32>
    %232 = arith.cmpi eq, %230, %231 : vector<8x128xi32>
    %c8_i32_92 = arith.constant 8 : i32
    %233 = vector.broadcast %c8_i32_92 : i32 to vector<8x128xi32>
    %234 = arith.andi %5, %233 : vector<8x128xi32>
    %c0_i32_93 = arith.constant 0 : i32
    %235 = vector.broadcast %c0_i32_93 : i32 to vector<8x128xi32>
    %236 = arith.cmpi eq, %234, %235 : vector<8x128xi32>
    %237 = arith.xori %232, %236 : vector<8x128xi1>
    %238 = arith.maximumf %220, %228 : vector<8x128xf32>
    %239 = arith.minimumf %220, %228 : vector<8x128xf32>
    %240 = arith.select %237, %238, %239 : vector<8x128xi1>, vector<8x128xf32>
    %c7_i32_94 = arith.constant 7 : i32
    %241 = tpu.dynamic_rotate %240 by %c7_i32_94 dim 0 : vector<8x128xf32>, i32 -> vector<8x128xf32>
    %c1_i32_95 = arith.constant 1 : i32
    %242 = tpu.dynamic_rotate %240 by %c1_i32_95 dim 0 : vector<8x128xf32>, i32 -> vector<8x128xf32>
    %c1_i32_96 = arith.constant 1 : i32
    %243 = vector.broadcast %c1_i32_96 : i32 to vector<8x128xi32>
    %244 = arith.andi %5, %243 : vector<8x128xi32>
    %c0_i32_97 = arith.constant 0 : i32
    %245 = vector.broadcast %c0_i32_97 : i32 to vector<8x128xi32>
    %246 = arith.cmpi eq, %244, %245 : vector<8x128xi32>
    %247 = arith.xori %246, %16 : vector<8x128xi1>
    %248 = arith.select %247, %241, %242 : vector<8x128xi1>, vector<8x128xf32>
    %c1_i32_98 = arith.constant 1 : i32
    %249 = vector.broadcast %c1_i32_98 : i32 to vector<8x128xi32>
    %250 = arith.andi %5, %249 : vector<8x128xi32>
    %c0_i32_99 = arith.constant 0 : i32
    %251 = vector.broadcast %c0_i32_99 : i32 to vector<8x128xi32>
    %252 = arith.cmpi eq, %250, %251 : vector<8x128xi32>
    %c8_i32_100 = arith.constant 8 : i32
    %253 = vector.broadcast %c8_i32_100 : i32 to vector<8x128xi32>
    %254 = arith.andi %5, %253 : vector<8x128xi32>
    %c0_i32_101 = arith.constant 0 : i32
    %255 = vector.broadcast %c0_i32_101 : i32 to vector<8x128xi32>
    %256 = arith.cmpi eq, %254, %255 : vector<8x128xi32>
    %257 = arith.xori %252, %256 : vector<8x128xi1>
    %258 = arith.maximumf %240, %248 : vector<8x128xf32>
    %259 = arith.minimumf %240, %248 : vector<8x128xf32>
    %260 = arith.select %257, %258, %259 : vector<8x128xi1>, vector<8x128xf32>
    %c7_i32_102 = arith.constant 7 : i32
    %261 = tpu.dynamic_rotate %260 by %c7_i32_102 dim 0 : vector<8x128xf32>, i32 -> vector<8x128xf32>
    %c1_i32_103 = arith.constant 1 : i32
    %262 = tpu.dynamic_rotate %260 by %c1_i32_103 dim 0 : vector<8x128xf32>, i32 -> vector<8x128xf32>
    %c1_i32_104 = arith.constant 1 : i32
    %263 = vector.broadcast %c1_i32_104 : i32 to vector<8x128xi32>
    %264 = arith.andi %5, %263 : vector<8x128xi32>
    %c0_i32_105 = arith.constant 0 : i32
    %265 = vector.broadcast %c0_i32_105 : i32 to vector<8x128xi32>
    %266 = arith.cmpi eq, %264, %265 : vector<8x128xi32>
    %267 = arith.xori %266, %16 : vector<8x128xi1>
    %268 = arith.select %267, %261, %262 : vector<8x128xi1>, vector<8x128xf32>
    %c6_i32_106 = arith.constant 6 : i32
    %269 = tpu.dynamic_rotate %268 by %c6_i32_106 dim 0 : vector<8x128xf32>, i32 -> vector<8x128xf32>
    %c2_i32_107 = arith.constant 2 : i32
    %270 = tpu.dynamic_rotate %268 by %c2_i32_107 dim 0 : vector<8x128xf32>, i32 -> vector<8x128xf32>
    %c2_i32_108 = arith.constant 2 : i32
    %271 = vector.broadcast %c2_i32_108 : i32 to vector<8x128xi32>
    %272 = arith.andi %5, %271 : vector<8x128xi32>
    %c0_i32_109 = arith.constant 0 : i32
    %273 = vector.broadcast %c0_i32_109 : i32 to vector<8x128xi32>
    %274 = arith.cmpi eq, %272, %273 : vector<8x128xi32>
    %275 = arith.xori %274, %16 : vector<8x128xi1>
    %276 = arith.select %275, %269, %270 : vector<8x128xi1>, vector<8x128xf32>
    %c4_i32_110 = arith.constant 4 : i32
    %277 = tpu.dynamic_rotate %276 by %c4_i32_110 dim 0 : vector<8x128xf32>, i32 -> vector<8x128xf32>
    %c4_i32_111 = arith.constant 4 : i32
    %278 = tpu.dynamic_rotate %276 by %c4_i32_111 dim 0 : vector<8x128xf32>, i32 -> vector<8x128xf32>
    %c4_i32_112 = arith.constant 4 : i32
    %279 = vector.broadcast %c4_i32_112 : i32 to vector<8x128xi32>
    %280 = arith.andi %5, %279 : vector<8x128xi32>
    %c0_i32_113 = arith.constant 0 : i32
    %281 = vector.broadcast %c0_i32_113 : i32 to vector<8x128xi32>
    %282 = arith.cmpi eq, %280, %281 : vector<8x128xi32>
    %283 = arith.xori %282, %16 : vector<8x128xi1>
    %284 = arith.select %283, %277, %278 : vector<8x128xi1>, vector<8x128xf32>
    %cst_114 = arith.constant 0.000000e+00 : f32
    %285 = vector.broadcast %cst_114 : f32 to vector<8x128xf32>
    %286 = arith.select %7, %138, %285 : vector<8x128xi1>, vector<8x128xf32>
    %cst_115 = arith.constant 0.000000e+00 : f32
    %287 = vector.broadcast %cst_115 : f32 to vector<8x128xf32>
    %288 = arith.select %7, %260, %287 : vector<8x128xi1>, vector<8x128xf32>
    %cst_116 = arith.constant 0.000000e+00 : f32
    %289 = vector.broadcast %cst_116 : f32 to vector<8x128xf32>
    %290 = arith.select %7, %284, %289 : vector<8x128xi1>, vector<8x128xf32>
    %cst_117 = arith.constant dense<0.000000e+00> : vector<128xf32>
    %291 = vector.multi_reduction <add>, %286, %cst_117 [0] : vector<8x128xf32> to vector<128xf32>
    %292 = vector.shape_cast %291 : vector<128xf32> to vector<1x128xf32>
    %cst_118 = arith.constant 1.250000e-01 : f32
    %293 = vector.broadcast %cst_118 : f32 to vector<1x128xf32>
    %294 = arith.mulf %292, %293 : vector<1x128xf32>
    %cst_119 = arith.constant dense<0.000000e+00> : vector<128xf32>
    %295 = vector.multi_reduction <add>, %288, %cst_119 [0] : vector<8x128xf32> to vector<128xf32>
    %296 = vector.shape_cast %295 : vector<128xf32> to vector<1x128xf32>
    %cst_120 = arith.constant 1.250000e-01 : f32
    %297 = vector.broadcast %cst_120 : f32 to vector<1x128xf32>
    %298 = arith.mulf %296, %297 : vector<1x128xf32>
    %299 = vector.broadcast %294 : vector<1x128xf32> to vector<8x128xf32>
    %300 = arith.subf %286, %299 : vector<8x128xf32>
    %cst_121 = arith.constant 0.000000e+00 : f32
    %301 = vector.broadcast %cst_121 : f32 to vector<8x128xf32>
    %302 = arith.select %7, %300, %301 : vector<8x128xi1>, vector<8x128xf32>
    %303 = vector.broadcast %298 : vector<1x128xf32> to vector<8x128xf32>
    %304 = arith.subf %288, %303 : vector<8x128xf32>
    %cst_122 = arith.constant 0.000000e+00 : f32
    %305 = vector.broadcast %cst_122 : f32 to vector<8x128xf32>
    %306 = arith.select %7, %304, %305 : vector<8x128xi1>, vector<8x128xf32>
    %307 = vector.broadcast %298 : vector<1x128xf32> to vector<8x128xf32>
    %308 = arith.subf %290, %307 : vector<8x128xf32>
    %cst_123 = arith.constant 0.000000e+00 : f32
    %309 = vector.broadcast %cst_123 : f32 to vector<8x128xf32>
    %310 = arith.select %7, %308, %309 : vector<8x128xi1>, vector<8x128xf32>
    %311 = arith.mulf %302, %302 : vector<8x128xf32>
    %312 = arith.mulf %306, %306 : vector<8x128xf32>
    %313 = arith.mulf %310, %310 : vector<8x128xf32>
    %cst_124 = arith.constant dense<0.000000e+00> : vector<128xf32>
    %314 = vector.multi_reduction <add>, %311, %cst_124 [0] : vector<8x128xf32> to vector<128xf32>
    %315 = vector.shape_cast %314 : vector<128xf32> to vector<1x128xf32>
    %316 = arith.mulf %311, %311 : vector<8x128xf32>
    %cst_125 = arith.constant dense<0.000000e+00> : vector<128xf32>
    %317 = vector.multi_reduction <add>, %316, %cst_125 [0] : vector<8x128xf32> to vector<128xf32>
    %318 = vector.shape_cast %317 : vector<128xf32> to vector<1x128xf32>
    %cst_126 = arith.constant dense<0.000000e+00> : vector<128xf32>
    %319 = vector.multi_reduction <add>, %312, %cst_126 [0] : vector<8x128xf32> to vector<128xf32>
    %320 = vector.shape_cast %319 : vector<128xf32> to vector<1x128xf32>
    %321 = arith.mulf %312, %312 : vector<8x128xf32>
    %cst_127 = arith.constant dense<0.000000e+00> : vector<128xf32>
    %322 = vector.multi_reduction <add>, %321, %cst_127 [0] : vector<8x128xf32> to vector<128xf32>
    %323 = vector.shape_cast %322 : vector<128xf32> to vector<1x128xf32>
    %324 = arith.mulf %302, %306 : vector<8x128xf32>
    %cst_128 = arith.constant dense<0.000000e+00> : vector<128xf32>
    %325 = vector.multi_reduction <add>, %324, %cst_128 [0] : vector<8x128xf32> to vector<128xf32>
    %326 = vector.shape_cast %325 : vector<128xf32> to vector<1x128xf32>
    %327 = arith.mulf %311, %312 : vector<8x128xf32>
    %cst_129 = arith.constant dense<0.000000e+00> : vector<128xf32>
    %328 = vector.multi_reduction <add>, %327, %cst_129 [0] : vector<8x128xf32> to vector<128xf32>
    %329 = vector.shape_cast %328 : vector<128xf32> to vector<1x128xf32>
    %330 = arith.mulf %302, %310 : vector<8x128xf32>
    %cst_130 = arith.constant dense<0.000000e+00> : vector<128xf32>
    %331 = vector.multi_reduction <add>, %330, %cst_130 [0] : vector<8x128xf32> to vector<128xf32>
    %332 = vector.shape_cast %331 : vector<128xf32> to vector<1x128xf32>
    %333 = arith.mulf %311, %313 : vector<8x128xf32>
    %cst_131 = arith.constant dense<0.000000e+00> : vector<128xf32>
    %334 = vector.multi_reduction <add>, %333, %cst_131 [0] : vector<8x128xf32> to vector<128xf32>
    %335 = vector.shape_cast %334 : vector<128xf32> to vector<1x128xf32>
    %336 = arith.subf %294, %298 : vector<1x128xf32>
    %337 = arith.subf %294, %298 : vector<1x128xf32>
    %338 = arith.mulf %336, %337 : vector<1x128xf32>
    %339 = arith.addf %315, %320 : vector<1x128xf32>
    %cst_132 = arith.constant 2.000000e+00 : f32
    %340 = vector.broadcast %cst_132 : f32 to vector<1x128xf32>
    %341 = arith.mulf %340, %326 : vector<1x128xf32>
    %342 = arith.subf %339, %341 : vector<1x128xf32>
    %cst_133 = arith.constant 8.000000e+00 : f32
    %343 = vector.broadcast %cst_133 : f32 to vector<1x128xf32>
    %344 = arith.mulf %343, %338 : vector<1x128xf32>
    %345 = arith.addf %342, %344 : vector<1x128xf32>
    %346 = arith.addf %315, %320 : vector<1x128xf32>
    %cst_134 = arith.constant 2.000000e+00 : f32
    %347 = vector.broadcast %cst_134 : f32 to vector<1x128xf32>
    %348 = arith.mulf %347, %332 : vector<1x128xf32>
    %349 = arith.subf %346, %348 : vector<1x128xf32>
    %cst_135 = arith.constant 8.000000e+00 : f32
    %350 = vector.broadcast %cst_135 : f32 to vector<1x128xf32>
    %351 = arith.mulf %350, %338 : vector<1x128xf32>
    %352 = arith.addf %349, %351 : vector<1x128xf32>
    %cst_136 = arith.constant 1.600000e+01 : f32
    %353 = vector.broadcast %cst_136 : f32 to vector<1x128xf32>
    %354 = arith.mulf %353, %318 : vector<1x128xf32>
    %cst_137 = arith.constant 6.000000e+00 : f32
    %355 = vector.broadcast %cst_137 : f32 to vector<1x128xf32>
    %356 = arith.mulf %355, %315 : vector<1x128xf32>
    %357 = arith.mulf %356, %315 : vector<1x128xf32>
    %358 = arith.addf %354, %357 : vector<1x128xf32>
    %cst_138 = arith.constant 1.600000e+01 : f32
    %359 = vector.broadcast %cst_138 : f32 to vector<1x128xf32>
    %360 = arith.mulf %359, %323 : vector<1x128xf32>
    %cst_139 = arith.constant 6.000000e+00 : f32
    %361 = vector.broadcast %cst_139 : f32 to vector<1x128xf32>
    %362 = arith.mulf %361, %320 : vector<1x128xf32>
    %363 = arith.mulf %362, %320 : vector<1x128xf32>
    %364 = arith.addf %360, %363 : vector<1x128xf32>
    %cst_140 = arith.constant 1.600000e+01 : f32
    %365 = vector.broadcast %cst_140 : f32 to vector<1x128xf32>
    %366 = arith.mulf %365, %329 : vector<1x128xf32>
    %cst_141 = arith.constant 2.000000e+00 : f32
    %367 = vector.broadcast %cst_141 : f32 to vector<1x128xf32>
    %368 = arith.mulf %367, %315 : vector<1x128xf32>
    %369 = arith.mulf %368, %320 : vector<1x128xf32>
    %370 = arith.addf %366, %369 : vector<1x128xf32>
    %cst_142 = arith.constant 4.000000e+00 : f32
    %371 = vector.broadcast %cst_142 : f32 to vector<1x128xf32>
    %372 = arith.mulf %371, %326 : vector<1x128xf32>
    %373 = arith.mulf %372, %326 : vector<1x128xf32>
    %374 = arith.addf %370, %373 : vector<1x128xf32>
    %cst_143 = arith.constant 1.600000e+01 : f32
    %375 = vector.broadcast %cst_143 : f32 to vector<1x128xf32>
    %376 = arith.mulf %375, %335 : vector<1x128xf32>
    %cst_144 = arith.constant 2.000000e+00 : f32
    %377 = vector.broadcast %cst_144 : f32 to vector<1x128xf32>
    %378 = arith.mulf %377, %315 : vector<1x128xf32>
    %379 = arith.mulf %378, %320 : vector<1x128xf32>
    %380 = arith.addf %376, %379 : vector<1x128xf32>
    %cst_145 = arith.constant 4.000000e+00 : f32
    %381 = vector.broadcast %cst_145 : f32 to vector<1x128xf32>
    %382 = arith.mulf %381, %332 : vector<1x128xf32>
    %383 = arith.mulf %382, %332 : vector<1x128xf32>
    %384 = arith.addf %380, %383 : vector<1x128xf32>
    %385 = arith.addf %358, %364 : vector<1x128xf32>
    %cst_146 = arith.constant 2.000000e+00 : f32
    %386 = vector.broadcast %cst_146 : f32 to vector<1x128xf32>
    %387 = arith.mulf %386, %374 : vector<1x128xf32>
    %388 = arith.subf %385, %387 : vector<1x128xf32>
    %cst_147 = arith.constant 1.562500e-02 : f32
    %389 = vector.broadcast %cst_147 : f32 to vector<1x128xf32>
    %390 = arith.mulf %388, %389 : vector<1x128xf32>
    %391 = arith.addf %358, %364 : vector<1x128xf32>
    %cst_148 = arith.constant 2.000000e+00 : f32
    %392 = vector.broadcast %cst_148 : f32 to vector<1x128xf32>
    %393 = arith.mulf %392, %384 : vector<1x128xf32>
    %394 = arith.subf %391, %393 : vector<1x128xf32>
    %cst_149 = arith.constant 1.562500e-02 : f32
    %395 = vector.broadcast %cst_149 : f32 to vector<1x128xf32>
    %396 = arith.mulf %394, %395 : vector<1x128xf32>
    %cst_150 = arith.constant 0.899999976 : f32
    %397 = vector.broadcast %cst_150 : f32 to vector<1x128xf32>
    %398 = arith.mulf %397, %345 : vector<1x128xf32>
    %cst_151 = arith.constant 1.000000e-01 : f32
    %399 = vector.broadcast %cst_151 : f32 to vector<1x128xf32>
    %400 = arith.mulf %399, %390 : vector<1x128xf32>
    %401 = arith.addf %398, %400 : vector<1x128xf32>
    %cst_152 = arith.constant 0.899999976 : f32
    %402 = vector.broadcast %cst_152 : f32 to vector<1x128xf32>
    %403 = arith.mulf %402, %352 : vector<1x128xf32>
    %cst_153 = arith.constant 1.000000e-01 : f32
    %404 = vector.broadcast %cst_153 : f32 to vector<1x128xf32>
    %405 = arith.mulf %404, %396 : vector<1x128xf32>
    %406 = arith.addf %403, %405 : vector<1x128xf32>
    %407 = arith.minimumf %401, %406 : vector<1x128xf32>
    %c0_154 = arith.constant 0 : index
    %c0_155 = arith.constant 0 : index
    %408 = vector.load %arg4[%c0_154, %c0_155] : memref<1x128xf32, #tpu.memory_space<vmem>>, vector<1x128xf32>
    tpu.vector_store %arg4[%c0_154, %c0_155], %407 {strides = array<i32>} : memref<1x128xf32, #tpu.memory_space<vmem>>, vector<1x128xf32>,
    return
  }
  func.func @transform_0(%arg0: i32) -> (i32, i32) {
    %c0_i32 = arith.constant 0 : i32
    %c0_i32_0 = arith.constant 0 : i32
    %c0_i32_1 = arith.constant 0 : i32
    return %c0_i32, %c0_i32_0 : i32, i32
  }
  func.func @transform_1(%arg0: i32) -> (i32, i32) {
    %c0_i32 = arith.constant 0 : i32
    %c0_i32_0 = arith.constant 0 : i32
    %c0_i32_1 = arith.constant 0 : i32
    return %c0_i32, %c0_i32_0 : i32, i32
  }
  func.func @transform_2(%arg0: i32) -> (i32, i32) {
    %c0_i32 = arith.constant 0 : i32
    %c0_i32_0 = arith.constant 0 : i32
    return %c0_i32, %arg0 : i32, i32
  }
  func.func @transform_3(%arg0: i32) -> (i32, i32) {
    %c0_i32 = arith.constant 0 : i32
    %c0_i32_0 = arith.constant 0 : i32
    return %c0_i32, %arg0 : i32, i32
  }
}

</mosaic_0001>

<llo_original>
// kernel: representation_collapse_loss.3
$region0: #{representation_collapse_loss.3}
  #allocation0 [shape = 'u32[]', space=smem, size = 0x4, offset = 0x4, fixed_abs, tag = 'smem constant byte address 0x4 - core index']
  #allocation1 [shape = 'u32[144,128]{1,0:T(1,128)}', space=vmem, size = 0x12000, scoped, tag = 'internal scratch']
  %s0 = inlined_call_operand.vmem [shape: f32[8,32], index: 0, kind: input, shape index: {}]
  %s1 = inlined_call_operand.vmem [shape: f32[8,32], index: 1, kind: input, shape index: {}]
  %s2 = inlined_call_operand.vmem [shape: f32[32,128], index: 2, kind: input, shape index: {}]
  %s3 = inlined_call_operand.vmem [shape: f32[1,128], index: 3, kind: output, shape index: {}]
  %s4 = sld [smem:[#allocation0]]
  $region22: #{representation_collapse_loss.3} parent=0
    _
  %s6 = ssub.s32 1, %s4
  %s7 = scalar_select 0, %s6, %s4
  // Predicated region
  $region2: #{representation_collapse_loss.3} parent=0 // pred_check
    _
  $region3: #{representation_collapse_loss.3} parent=0 // pred_check_branch
    %9 = sbr.rel (0) target = $region5
  $region4: #{representation_collapse_loss.3} parent=0 // pred_region
    _
  $region5: #{representation_collapse_loss.3} parent=0 // pred_fallthru
    _
  // Predicated region
  $region6: #{representation_collapse_loss.3} parent=0 // pred_check
    _
  $region7: #{representation_collapse_loss.3} parent=0 // pred_check_branch
    %11 = sbr.rel (0) target = $region9
  $region8: #{representation_collapse_loss.3} parent=0 // pred_region
    _
  $region9: #{representation_collapse_loss.3} parent=0 // pred_fallthru
    _
  // Predicated region
  $region10: #{representation_collapse_loss.3} parent=0 // pred_check
    _
  $region11: #{representation_collapse_loss.3} parent=0 // pred_check_branch
    %13 = sbr.rel (0) target = $region13
  $region12: #{representation_collapse_loss.3} parent=0 // pred_region
    _
  $region13: #{representation_collapse_loss.3} parent=0 // pred_fallthru
    _
  %v14 = vld [vmem:[%s2] sm:$0xff]
  %v15 = vld [vmem:[%s2 + $0x8] sm:$0xff]
  %v16 = vld [vmem:[%s2 + $0x10] sm:$0xff]
  %v17 = vld [vmem:[%s2 + $0x18] sm:$0xff]
  %v18 = vld [vmem:[%s0] sm:$0xff]
  %vm19 = vcmask 261120
  %v21 = vsel %vm19, %v18, 0
  %23 = vmatprep.subr.mxu0 0.0
  %24 = vmatpush1.msra.mxu0 %v14
  %25 = vmatprep.subr.mxu0 0.0
  %26 = vmatpush1.msra.mxu0 %v15
  %27 = vmatprep.subr.mxu0 0.0
  %28 = vmatpush1.msra.mxu0 %v16
  %29 = vmatprep.subr.mxu0 0.0
  %30 = vmatpush1.msra.mxu0 %v17
  %31 = vmatprep.subr.mxu0 0.0
  %32 = vmatpush1.msra.mxu0 0.0
  %33 = vmatprep.subr.mxu0 0.0
  %34 = vmatpush1.msra.mxu0 0.0
  %35 = vmatprep.subr.mxu0 0.0
  %36 = vmatpush1.msra.mxu0 0.0
  %37 = vmatprep.subr.mxu0 0.0
  %38 = vmatpush1.msra.mxu0 0.0
  %39 = vmatprep.subr.mxu0 0.0
  %40 = vmatpush1.msra.mxu0 0.0
  %41 = vmatprep.subr.mxu0 0.0
  %42 = vmatpush1.msra.mxu0 0.0
  %43 = vmatprep.subr.mxu0 0.0
  %44 = vmatpush1.msra.mxu0 0.0
  %45 = vmatprep.subr.mxu0 0.0
  %46 = vmatpush1.msra.mxu0 0.0
  %47 = vmatprep.subr.mxu0 0.0
  %48 = vmatpush1.msra.mxu0 0.0
  %49 = vmatprep.subr.mxu0 0.0
  %50 = vmatpush1.msra.mxu0 0.0
  %51 = vmatprep.subr.mxu0 0.0
  %52 = vmatpush1.msra.mxu0 0.0
  %53 = vmatprep.subr.mxu0 0.0
  %54 = vmatpush1.msra.mxu0 0.0
  %55 = vmatprep.subr.mxu0 0.0
  %56 = vmatpush1.msra.mxu0 0.0
  %57 = vmatprep.subr.mxu0 0.0
  %58 = vmatpush1.msra.mxu0 0.0
  %59 = vmatprep.subr.mxu0 0.0
  %60 = vmatpush1.msra.mxu0 0.0
  %61 = vmatprep.subr.mxu0 0.0
  %62 = vmatpush1.msra.mxu0 0.0
  %63 = vmatprep.subr.mxu0 0.0
  %64 = vmatpush1.msra.mxu0 0.0
  %65 = vmatprep.subr.mxu0 0.0
  %66 = vmatpush1.msra.mxu0 0.0
  %67 = vmatprep.subr.mxu0 0.0
  %68 = vmatpush1.msra.mxu0 0.0
  %69 = vmatprep.subr.mxu0 0.0
  %70 = vmatpush1.msra.mxu0 0.0
  %71 = vmatprep.subr.mxu0 0.0
  %72 = vmatpush1.msra.mxu0 0.0
  %73 = vmatprep.subr.mxu0 0.0
  %74 = vmatpush1.msra.mxu0 0.0
  %75 = vmatprep.subr.mxu0 0.0
  %76 = vmatpush1.msra.mxu0 0.0
  %77 = vmatprep.subr.mxu0 0.0
  %78 = vmatpush1.msra.mxu0 0.0
  %79 = vmatprep.subr.mxu0 0.0
  %80 = vmatpush1.msra.mxu0 0.0
  %81 = vmatprep.subr.mxu0 0.0
  %82 = vmatpush1.msra.mxu0 0.0
  %83 = vmatprep.subr.mxu0 0.0
  %84 = vmatpush1.msra.mxu0 0.0
  %85 = vmatprep.subr.mxu0 0.0
  %86 = vmatpush1.msra.mxu0 0.0
  %87 = vmatprep.mubr.f32.mxu0 0.0
  %88 = vmatmul.mubr.f32.gmra.mrb[0].mxu0 %v21
  %v89 = vpop.f32.mrb[0].mxu0
  %v90 = vadd.f32 0.0, %v89
  %v91 = vpop.f32.mrb[0].mxu0
  %92 = vdwg.mxu0
  %v93 = vld [vmem:[%s1] sm:$0xff]
  %v95 = vsel %vm19, %v93, 0
  %97 = vmatprep.subr.mxu0 0.0
  %98 = vmatpush1.msra.mxu0 %v14
  %99 = vmatprep.subr.mxu0 0.0
  %100 = vmatpush1.msra.mxu0 %v15
  %101 = vmatprep.subr.mxu0 0.0
  %102 = vmatpush1.msra.mxu0 %v16
  %103 = vmatprep.subr.mxu0 0.0
  %104 = vmatpush1.msra.mxu0 %v17
  %105 = vmatprep.subr.mxu0 0.0
  %106 = vmatpush1.msra.mxu0 0.0
  %107 = vmatprep.subr.mxu0 0.0
  %108 = vmatpush1.msra.mxu0 0.0
  %109 = vmatprep.subr.mxu0 0.0
  %110 = vmatpush1.msra.mxu0 0.0
  %111 = vmatprep.subr.mxu0 0.0
  %112 = vmatpush1.msra.mxu0 0.0
  %113 = vmatprep.subr.mxu0 0.0
  %114 = vmatpush1.msra.mxu0 0.0
  %115 = vmatprep.subr.mxu0 0.0
  %116 = vmatpush1.msra.mxu0 0.0
  %117 = vmatprep.subr.mxu0 0.0
  %118 = vmatpush1.msra.mxu0 0.0
  %119 = vmatprep.subr.mxu0 0.0
  %120 = vmatpush1.msra.mxu0 0.0
  %121 = vmatprep.subr.mxu0 0.0
  %122 = vmatpush1.msra.mxu0 0.0
  %123 = vmatprep.subr.mxu0 0.0
  %124 = vmatpush1.msra.mxu0 0.0
  %125 = vmatprep.subr.mxu0 0.0
  %126 = vmatpush1.msra.mxu0 0.0
  %127 = vmatprep.subr.mxu0 0.0
  %128 = vmatpush1.msra.mxu0 0.0
  %129 = vmatprep.subr.mxu0 0.0
  %130 = vmatpush1.msra.mxu0 0.0
  %131 = vmatprep.subr.mxu0 0.0
  %132 = vmatpush1.msra.mxu0 0.0
  %133 = vmatprep.subr.mxu0 0.0
  %134 = vmatpush1.msra.mxu0 0.0
  %135 = vmatprep.subr.mxu0 0.0
  %136 = vmatpush1.msra.mxu0 0.0
  %137 = vmatprep.subr.mxu0 0.0
  %138 = vmatpush1.msra.mxu0 0.0
  %139 = vmatprep.subr.mxu0 0.0
  %140 = vmatpush1.msra.mxu0 0.0
  %141 = vmatprep.subr.mxu0 0.0
  %142 = vmatpush1.msra.mxu0 0.0
  %143 = vmatprep.subr.mxu0 0.0
  %144 = vmatpush1.msra.mxu0 0.0
  %145 = vmatprep.subr.mxu0 0.0
  %146 = vmatpush1.msra.mxu0 0.0
  %147 = vmatprep.subr.mxu0 0.0
  %148 = vmatpush1.msra.mxu0 0.0
  %149 = vmatprep.subr.mxu0 0.0
  %150 = vmatpush1.msra.mxu0 0.0
  %151 = vmatprep.subr.mxu0 0.0
  %152 = vmatpush1.msra.mxu0 0.0
  %153 = vmatprep.subr.mxu0 0.0
  %154 = vmatpush1.msra.mxu0 0.0
  %155 = vmatprep.subr.mxu0 0.0
  %156 = vmatpush1.msra.mxu0 0.0
  %157 = vmatprep.subr.mxu0 0.0
  %158 = vmatpush1.msra.mxu0 0.0
  %159 = vmatprep.subr.mxu0 0.0
  %160 = vmatpush1.msra.mxu0 0.0
  %161 = vmatprep.mubr.f32.mxu0 0.0
  %162 = vmatmul.mubr.f32.gmra.mrb[0].mxu0 %v95
  %v163 = vpop.f32.mrb[0].mxu0
  %v164 = vadd.f32 0.0, %v163
  %v165 = vpop.f32.mrb[0].mxu0
  %166 = vdwg.mxu0
  %v167 = vlaneseq
  %v168 = vshrl.u32 %v167, 7
  %vm169 = vcmp.lt.s32.totalorder %v168, 8
  %v170 = vcvt.s32.f32 %v168
  %v171 = vrot.slane %v170, 7
  %vm172 = vcmp.eq.s32.totalorder %v168, 0
  %v173 = vsub.f32 %v170, 1.0
  %v174 = vsel %vm172, 7.0, %v173
  %vm175 = vcmp.ne.f32.partialorder %v171, %v174
  %v176 = vsel %vm169, %v90, 1e+30
  %v177 = vrot.slane %v176, 1
  %v178 = vrot.slane %v176, 7
  %v179 = vand.u32 %v168, 1
  %vm180 = vcmp.eq.s32.totalorder %v179, 0
  %vm181 = vmxor %vm180, %vm175
  %v182 = vsel %vm181, %v177, %v178
  %v183 = vand.u32 %v168, 2
  %vm184 = vcmp.eq.s32.totalorder %v183, 0
  %vm185 = vmxor %vm180, %vm184
  %v186 = vmax.f32 %v176, %v182
  %v187 = vmin.f32 %v176, %v182
  %v188 = vsel %vm185, %v186, %v187
  %v189 = vrot.slane %v188, 2
  %v190 = vrot.slane %v188, 6
  %vm191 = vmxor %vm184, %vm175
  %v192 = vsel %vm191, %v189, %v190
  %v193 = vand.u32 %v168, 4
  %vm194 = vcmp.eq.s32.totalorder %v193, 0
  %vm195 = vmxor %vm184, %vm194
  %v196 = vmax.f32 %v188, %v192
  %v197 = vmin.f32 %v188, %v192
  %v198 = vsel %vm195, %v196, %v197
  %v199 = vrot.slane %v198, 1
  %v200 = vrot.slane %v198, 7
  %v201 = vsel %vm181, %v199, %v200
  %vm202 = vmxor %vm180, %vm194
  %v203 = vmax.f32 %v198, %v201
  %v204 = vmin.f32 %v198, %v201
  %v205 = vsel %vm202, %v203, %v204
  %v206 = vrot.slane %v205, 4
  %v207 = vand.u32 %v168, 8
  %vm208 = vcmp.eq.s32.totalorder %v207, 0
  %vm209 = vmxor %vm194, %vm208
  %v210 = vmax.f32 %v205, %v206
  %v211 = vmin.f32 %v205, %v206
  %v212 = vsel %vm209, %v210, %v211
  %v213 = vrot.slane %v212, 2
  %v214 = vrot.slane %v212, 6
  %v215 = vsel %vm191, %v213, %v214
  %vm216 = vmxor %vm184, %vm208
  %v217 = vmax.f32 %v212, %v215
  %v218 = vmin.f32 %v212, %v215
  %v219 = vsel %vm216, %v217, %v218
  %v220 = vrot.slane %v219, 1
  %v221 = vrot.slane %v219, 7
  %v222 = vsel %vm181, %v220, %v221
  %vm223 = vmxor %vm180, %vm208
  %v224 = vmax.f32 %v219, %v222
  %v225 = vmin.f32 %v219, %v222
  %v226 = vsel %vm223, %v224, %v225
  %v227 = vsel %vm169, %v164, 1e+30
  %v228 = vrot.slane %v227, 1
  %v229 = vrot.slane %v227, 7
  %v230 = vsel %vm181, %v228, %v229
  %v231 = vmax.f32 %v227, %v230
  %v232 = vmin.f32 %v227, %v230
  %v233 = vsel %vm185, %v231, %v232
  %v234 = vrot.slane %v233, 2
  %v235 = vrot.slane %v233, 6
  %v236 = vsel %vm191, %v234, %v235
  %v237 = vmax.f32 %v233, %v236
  %v238 = vmin.f32 %v233, %v236
  %v239 = vsel %vm195, %v237, %v238
  %v240 = vrot.slane %v239, 1
  %v241 = vrot.slane %v239, 7
  %v242 = vsel %vm181, %v240, %v241
  %v243 = vmax.f32 %v239, %v242
  %v244 = vmin.f32 %v239, %v242
  %v245 = vsel %vm202, %v243, %v244
  %v246 = vrot.slane %v245, 4
  %v247 = vmax.f32 %v245, %v246
  %v248 = vmin.f32 %v245, %v246
  %v249 = vsel %vm209, %v247, %v248
  %v250 = vrot.slane %v249, 2
  %v251 = vrot.slane %v249, 6
  %v252 = vsel %vm191, %v250, %v251
  %v253 = vmax.f32 %v249, %v252
  %v254 = vmin.f32 %v249, %v252
  %v255 = vsel %vm216, %v253, %v254
  %v256 = vrot.slane %v255, 1
  %v257 = vrot.slane %v255, 7
  %v258 = vsel %vm181, %v256, %v257
  %v259 = vmax.f32 %v255, %v258
  %v260 = vmin.f32 %v255, %v258
  %v261 = vsel %vm223, %v259, %v260
  %v262 = vrot.slane %v261, 1
  %v263 = vrot.slane %v261, 7
  %v264 = vsel %vm181, %v262, %v263
  %v265 = vrot.slane %v264, 2
  %v266 = vrot.slane %v264, 6
  %v267 = vsel %vm191, %v265, %v266
  %v268 = vrot.slane %v267, 4
  %v269 = vsel %vm169, %v226, 0.0
  %v270 = vsel %vm169, %v261, 0.0
  %v271 = vsel %vm169, %v268, 0.0
  %v272 = vrot.slane %v269, 4
  %v273 = vadd.f32 %v269, %v272
  %v274 = vrot.slane %v273, 2
  %v275 = vadd.f32 %v273, %v274
  %v276 = vrot.slane %v275, 1
  %v277 = vadd.f32 %v275, %v276
  %v278 = vmul.f32 %v277, 0.125
  %v279 = vrot.slane %v270, 4
  %v280 = vadd.f32 %v270, %v279
  %v281 = vrot.slane %v280, 2
  %v282 = vadd.f32 %v280, %v281
  %v283 = vrot.slane %v282, 1
  %v284 = vadd.f32 %v282, %v283
  %v285 = vmul.f32 %v284, 0.125
  %v286 = vsub.f32 %v269, %v278
  %v287 = vsel %vm169, %v286, 0.0
  %v288 = vsub.f32 %v270, %v285
  %v289 = vsel %vm169, %v288, 0.0
  %v290 = vsub.f32 %v271, %v285
  %v291 = vsel %vm169, %v290, 0.0
  %v292 = vmul.f32 %v287, %v287
  %v293 = vmul.f32 %v289, %v289
  %v294 = vmul.f32 %v291, %v291
  %v295 = vrot.slane %v292, 4
  %v296 = vadd.f32 %v292, %v295
  %v297 = vrot.slane %v296, 2
  %v298 = vadd.f32 %v296, %v297
  %v299 = vrot.slane %v298, 1
  %v300 = vadd.f32 %v298, %v299
  %v301 = vmul.f32 %v292, %v292
  %v302 = vrot.slane %v301, 4
  %v303 = vadd.f32 %v301, %v302
  %v304 = vrot.slane %v303, 2
  %v305 = vadd.f32 %v303, %v304
  %v306 = vrot.slane %v305, 1
  %v307 = vadd.f32 %v305, %v306
  %v308 = vrot.slane %v293, 4
  %v309 = vadd.f32 %v293, %v308
  %v310 = vrot.slane %v309, 2
  %v311 = vadd.f32 %v309, %v310
  %v312 = vrot.slane %v311, 1
  %v313 = vadd.f32 %v311, %v312
  %v314 = vmul.f32 %v293, %v293
  %v315 = vrot.slane %v314, 4
  %v316 = vadd.f32 %v314, %v315
  %v317 = vrot.slane %v316, 2
  %v318 = vadd.f32 %v316, %v317
  %v319 = vrot.slane %v318, 1
  %v320 = vadd.f32 %v318, %v319
  %v321 = vmul.f32 %v287, %v289
  %v322 = vrot.slane %v321, 4
  %v323 = vadd.f32 %v321, %v322
  %v324 = vrot.slane %v323, 2
  %v325 = vadd.f32 %v323, %v324
  %v326 = vrot.slane %v325, 1
  %v327 = vadd.f32 %v325, %v326
  %v328 = vmul.f32 %v292, %v293
  %v329 = vrot.slane %v328, 4
  %v330 = vadd.f32 %v328, %v329
  %v331 = vrot.slane %v330, 2
  %v332 = vadd.f32 %v330, %v331
  %v333 = vrot.slane %v332, 1
  %v334 = vadd.f32 %v332, %v333
  %v335 = vmul.f32 %v287, %v291
  %v336 = vrot.slane %v335, 4
  %v337 = vadd.f32 %v335, %v336
  %v338 = vrot.slane %v337, 2
  %v339 = vadd.f32 %v337, %v338
  %v340 = vrot.slane %v339, 1
  %v341 = vadd.f32 %v339, %v340
  %v342 = vmul.f32 %v292, %v294
  %v343 = vrot.slane %v342, 4
  %v344 = vadd.f32 %v342, %v343
  %v345 = vrot.slane %v344, 2
  %v346 = vadd.f32 %v344, %v345
  %v347 = vrot.slane %v346, 1
  %v348 = vadd.f32 %v346, %v347
  %v349 = vsub.f32 %v278, %v285
  %v350 = vmul.f32 %v349, %v349
  %v351 = vadd.f32 %v300, %v313
  %v352 = vmul.f32 %v327, 2.0
  %v353 = vsub.f32 %v351, %v352
  %v354 = vmul.f32 %v350, 8.0
  %v355 = vadd.f32 %v353, %v354
  %v356 = vmul.f32 %v341, 2.0
  %v357 = vsub.f32 %v351, %v356
  %v358 = vadd.f32 %v357, %v354
  %v359 = vmul.f32 %v307, 16.0
  %v360 = vmul.f32 %v300, 6.0
  %v361 = vmul.f32 %v360, %v300
  %v362 = vadd.f32 %v359, %v361
  %v363 = vmul.f32 %v320, 16.0
  %v364 = vmul.f32 %v313, 6.0
  %v365 = vmul.f32 %v364, %v313
  %v366 = vadd.f32 %v363, %v365
  %v367 = vmul.f32 %v334, 16.0
  %v368 = vmul.f32 %v300, 2.0
  %v369 = vmul.f32 %v368, %v313
  %v370 = vadd.f32 %v367, %v369
  %v371 = vmul.f32 %v327, 4.0
  %v372 = vmul.f32 %v371, %v327
  %v373 = vadd.f32 %v370, %v372
  %v374 = vmul.f32 %v348, 16.0
  %v375 = vadd.f32 %v374, %v369
  %v376 = vmul.f32 %v341, 4.0
  %v377 = vmul.f32 %v376, %v341
  %v378 = vadd.f32 %v375, %v377
  %v379 = vadd.f32 %v362, %v366
  %v380 = vmul.f32 %v373, 2.0
  %v381 = vsub.f32 %v379, %v380
  %v382 = vmul.f32 %v381, 0.015625
  %v383 = vmul.f32 %v378, 2.0
  %v384 = vsub.f32 %v379, %v383
  %v385 = vmul.f32 %v384, 0.015625
  %v386 = vmul.f32 %v355, 0.9
  %v387 = vmul.f32 %v382, 0.1
  %v388 = vadd.f32 %v386, %v387
  %v389 = vmul.f32 %v358, 0.9
  %v390 = vmul.f32 %v385, 0.1
  %v391 = vadd.f32 %v389, %v390
  %v392 = vmin.f32 %v388, %v391
  %393 = vst [vmem:[%s3] sm:$0x1] %v392
  // Predicated region
  $region14: #{representation_collapse_loss.3} parent=0 // pred_check
    _
  $region15: #{representation_collapse_loss.3} parent=0 // pred_check_branch
    %395 = sbr.rel (0) target = $region17
  $region16: #{representation_collapse_loss.3} parent=0 // pred_region
    _
  $region17: #{representation_collapse_loss.3} parent=0 // pred_fallthru
    _
  // Predicated region
  $region18: #{representation_collapse_loss.3} parent=0 // pred_check
    _
  $region19: #{representation_collapse_loss.3} parent=0 // pred_check_branch
    %397 = sbr.rel (0) target = $region21
  $region20: #{representation_collapse_loss.3} parent=0 // pred_region
    _
  $region21: #{representation_collapse_loss.3} parent=0 // pred_fallthru
    _

</llo_original>
